<compile_context>
chip_gen: v5e
topology: v5e:2x2
jax: 0.10.0
libtpu: 0.0.40
codegen_flags: <defaults>
</compile_context>

<pallas_src>
import math

import jax
import jax.numpy as jnp
from jax.experimental import pallas as pl
from jax.experimental.pallas import tpu as pltpu


def _cdiv(a, b):
    return -(-a // b)


# ============================ fused Pallas kernel ============================

def _attention_layer_kernel(x_ref, m_ref, w1b_ref, bias1_ref, w2b_ref, bias2_ref,
                            sel0_ref, sel1_ref, mexp_ref, ext0_ref, ext1_ref,
                            emb_out_ref, am_out_ref):
    """One row tile of the fused forward, in packed (lane-dense) layout.

    P original rows of width H live side by side in one W = P*H lane row.
    All per-row scalars (logits, gate, mask) are made group-constant across
    each row's H lanes via tiny constant matmuls, so the gate multiply and the
    big store are full-lane, unmasked vector ops.
    """
    x = x_ref[...].astype(jnp.float32)        # (tm, W) packed embedding rows
    m = m_ref[...].astype(jnp.float32)        # (tm, P) packed keep-mask (1=keep)

    # self.ac = Linear(H,H) -> ReLU -> Linear(H,2), block-diagonal packed form.
    h = jnp.dot(x, w1b_ref[...], preferred_element_type=jnp.float32) + bias1_ref[...]
    h = jnp.maximum(h, 0.0)                                              # (tm, W)
    attn = jnp.dot(h, w2b_ref[...], preferred_element_type=jnp.float32) + bias2_ref[...]
    # attn: (tm, 2P), lane 2j+c holds logit c of packed sub-row j.

    # Broadcast each sub-row's two logits across its H lanes (group-constant).
    a0 = jnp.dot(attn, sel0_ref[...], preferred_element_type=jnp.float32)  # (tm, W)
    a1 = jnp.dot(attn, sel1_ref[...], preferred_element_type=jnp.float32)  # (tm, W)

    # Straight-through hard argmax; forward arithmetic identical to the
    # reference: (eq(attn, max) - attn) + attn.  Exact ties set both cols to 1.
    mx = jnp.maximum(a0, a1)
    am0 = ((a0 == mx).astype(jnp.float32) - a0) + a0
    am1 = ((a1 == mx).astype(jnp.float32) - a1) + a1

    # Masked positions get the fixed [0, 1] vector.
    mb = jnp.dot(m, mexp_ref[...], preferred_element_type=jnp.float32)     # (tm, W)
    am0 = am0 * mb                      # + (1 - mb) * 0
    am1 = am1 * mb + (1.0 - mb)         # + (1 - mb) * 1

    # Gated embedding: full-lane multiply + lane-dense (unmasked) store.
    emb_out_ref[...] = (x * am0).astype(emb_out_ref.dtype)

    # Compact attention_mask: exact one-hot extraction of each sub-row's
    # (am0, am1) into row-major (tm, 2P) == (tm*P, 2).
    am_out_ref[...] = (jnp.dot(am0, ext0_ref[...], preferred_element_type=jnp.float32)
                       + jnp.dot(am1, ext1_ref[...], preferred_element_type=jnp.float32))


# ============================ wrapper ============================

def attention_layer_forward(params, embedding, mask, *, row_block=8192):
    """Forward pass of Attention_Layer.

    embedding: (B,S,H); mask: (B,S) of 0/1.
    Returns (embedding * attention_mask[...,0:1] in embedding.dtype,
             attention_mask (B,S,2) in float32).
    """
    B, S, H = embedding.shape
    M = B * S
    emb_dtype = embedding.dtype
    f32 = jnp.float32

    # --- lane packing: P original rows per 128-lane row when H divides 128 ---
    P = 128 // H if (H < 128 and 128 % H == 0 and M % (128 // H) == 0) else 1
    W = P * H
    Mp = M // P

    x_p = embedding.reshape(Mp, W)            # free contiguous reshape, native dtype
    m_p = mask.reshape(Mp, P)

    # --- tile selection: 8-aligned packed-row tiles, >=2 tiles when M permits
    #     (v7x has 2 TensorCores).  VMEM/tile at the default is ~4 blocks of
    #     (tm,128) f32 x 2 buffers ~= 4-8 MiB -> fits v5e's 16 MiB scoped VMEM. ---
    tm_default = max(8, _cdiv(row_block, P))  # packed rows per tile
    if Mp <= 8:
        tm = Mp
    else:
        n_tiles = max(2, _cdiv(Mp, tm_default))
        tm = _cdiv(_cdiv(Mp, n_tiles), 8) * 8
    n_tiles = _cdiv(Mp, tm)
    Mp_pad = n_tiles * tm
    if Mp_pad != Mp:                          # ragged M: pad (mask=0 rows), slice after
        x_p = jnp.pad(x_p, ((0, Mp_pad - Mp), (0, 0)))
        m_p = jnp.pad(m_p, ((0, Mp_pad - Mp), (0, 0)))

    # --- small constant operands: block-diagonal weights + selection matrices
    #     that keep per-row scalars group-constant across the packed lanes. ---
    w1 = params["w1"].astype(f32)             # (H, H)  (in, out)
    b1 = params["b1"].astype(f32)             # (H,)
    w2 = params["w2"].astype(f32)             # (H, 2)
    b2 = params["b2"].astype(f32)             # (2,)

    eye_p = jnp.eye(P, dtype=f32)
    w1_blk = jnp.kron(eye_p, w1)              # (W, W)
    w2_blk = jnp.kron(eye_p, w2)              # (W, 2P)
    b1_t = jnp.tile(b1, P).reshape(1, W)
    b2_t = jnp.tile(b2, P).reshape(1, 2 * P)

    lane = jnp.arange(W)
    grp = lane // H                           # packed sub-row of each lane
    pair = jnp.arange(2 * P)
    sel0 = (pair[:, None] == 2 * grp[None, :]).astype(f32)        # (2P, W)
    sel1 = (pair[:, None] == 2 * grp[None, :] + 1).astype(f32)    # (2P, W)
    mexp = (jnp.arange(P)[:, None] == grp[None, :]).astype(f32)   # (P,  W)
    ext0 = ((pair[None, :] % 2 == 0) &
            (lane[:, None] == (pair[None, :] // 2) * H)).astype(f32)   # (W, 2P)
    ext1 = ((pair[None, :] % 2 == 1) &
            (lane[:, None] == (pair[None, :] // 2) * H)).astype(f32)   # (W, 2P)

    # --- advisory cost estimate for XLA scheduling ---
    flops_row = (2 * W * W + 2 * W * (2 * P)       # block-diagonal Linears
                 + 2 * (2 * P) * W * 2             # logit broadcasts
                 + 2 * P * W                       # mask broadcast
                 + 2 * W * (2 * P) * 2)            # attention_mask extraction
    const_bytes = 4 * (w1_blk.size + w2_blk.size + b1_t.size + b2_t.size
                       + sel0.size + sel1.size + mexp.size + ext0.size + ext1.size)
    bytes_accessed = int(x_p.size * x_p.dtype.itemsize
                         + m_p.size * m_p.dtype.itemsize
                         + const_bytes
                         + Mp_pad * W * jnp.dtype(emb_dtype).itemsize   # emb out
                         + Mp_pad * 2 * P * 4)                          # am out
    cost = pl.CostEstimate(flops=int(Mp_pad * flops_row), transcendentals=0,
                           bytes_accessed=bytes_accessed)

    row_spec = pl.BlockSpec((tm, W), lambda i: (i, 0))

    def const(shape):
        return pl.BlockSpec(shape, lambda i: (0, 0))

    out_emb, am = pl.pallas_call(
        _attention_layer_kernel,
        out_shape=(jax.ShapeDtypeStruct((Mp_pad, W), emb_dtype),
                   jax.ShapeDtypeStruct((Mp_pad, 2 * P), f32)),
        grid=(n_tiles,),
        in_specs=[
            row_spec,                                   # packed embedding rows
            pl.BlockSpec((tm, P), lambda i: (i, 0)),    # packed mask rows
            const((W, W)), const((1, W)),               # w1 blockdiag, b1
            const((W, 2 * P)), const((1, 2 * P)),       # w2 blockdiag, b2
            const((2 * P, W)), const((2 * P, W)),       # logit broadcast sel0/sel1
            const((P, W)),                              # mask broadcast
            const((W, 2 * P)), const((W, 2 * P)),       # am extraction ext0/ext1
        ],
        out_specs=(row_spec, pl.BlockSpec((tm, 2 * P), lambda i: (i, 0))),
        compiler_params=pltpu.CompilerParams(
            dimension_semantics=("parallel",),
            vmem_limit_bytes=32 * 1024 * 1024),
        cost_estimate=cost,
    )(x_p, m_p, w1_blk, b1_t, w2_blk, b2_t, sel0, sel1, mexp, ext0, ext1)

    out_emb = out_emb[:Mp].reshape(B, S, H)
    am = am[:Mp].reshape(B, S, 2)
    return out_emb, am


# ============================ pure-JAX reference & checks ============================

def attention_layer_reference(params, embedding, mask):
    """Mirrors the PyTorch forward.  Also returns the |logit0-logit1| margin."""
    x = embedding.astype(jnp.float32)
    h = jnp.maximum(x @ params["w1"] + params["b1"], 0.0)
    attn = h @ params["w2"] + params["b2"]
    mx = jnp.max(attn, axis=-1, keepdims=True)
    hard = (attn == mx).astype(jnp.float32)
    am = (hard - attn) + attn
    m = mask[..., None].astype(jnp.float32)
    fill = jnp.concatenate([jnp.zeros_like(m), jnp.ones_like(m)], axis=-1)
    am = am * m + (1.0 - m) * fill
    out = (x * am[..., 0:1]).astype(embedding.dtype)
    margin = jnp.abs(attn[..., 0] - attn[..., 1])
    return out, am, margin


def _assert_matches_reference(params, embedding, mask, out_emb, am, tol=1e-5):
    ref_emb, ref_am, margin = attention_layer_reference(params, embedding, mask)
    # Rows whose two logits are near-tied can legitimately flip the hard argmax
    # under ulp-level matmul reordering; skip those (none expected in practice).
    ok = ((margin > 1e-4) | (mask == 0))[..., None]
    close = lambda a, b: jnp.abs(a - b) <= tol + tol * jnp.abs(b)
    assert bool(jnp.all(jnp.where(ok, close(out_emb.astype(jnp.float32),
                                            ref_emb.astype(jnp.float32)), True)))
    assert bool(jnp.all(jnp.where(ok, close(am, ref_am), True)))


# ============================ deterministic parameter init ============================

def init_attention_layer(key, h_dim):
    """nn.Linear-style init; weights stored (in_features, out_features)."""
    k1, k2, k3, k4 = jax.random.split(key, 4)
    lim = 1.0 / math.sqrt(h_dim)
    return {
        "w1": jax.random.uniform(k1, (h_dim, h_dim), jnp.float32, -lim, lim),
        "b1": jax.random.uniform(k2, (h_dim,), jnp.float32, -lim, lim),
        "w2": jax.random.uniform(k3, (h_dim, 2), jnp.float32, -lim, lim),
        "b2": jax.random.uniform(k4, (2,), jnp.float32, -lim, lim),
    }


# ============================ main ============================

if __name__ == "__main__":
    key = jax.random.PRNGKey(0)
    kp, ke, km = jax.random.split(key, 3)

    # Small shape consistent with the module.
    B, S, H = 2, 8, 32
    params = init_attention_layer(kp, H)
    embedding = jax.random.normal(ke, (B, S, H), jnp.float32)
    mask = jnp.ones((B, S), jnp.float32).at[:, S - 3:].set(0.0)   # pad last 3 positions

    fwd = jax.jit(attention_layer_forward)
    out_emb, attn_mask = fwd(params, embedding, mask)
    jax.block_until_ready((out_emb, attn_mask))

    assert out_emb.shape == (B, S, H) and out_emb.dtype == embedding.dtype
    assert attn_mask.shape == (B, S, 2) and attn_mask.dtype == jnp.float32
    assert bool(jnp.all(jnp.isfinite(out_emb))) and bool(jnp.all(jnp.isfinite(attn_mask)))
    _assert_matches_reference(params, embedding, mask, out_emb, attn_mask)
    # masked (padded) positions carry the fixed [0, 1] vector -> zeroed embedding
    assert bool(jnp.all(jnp.abs(out_emb[:, S - 3:, :]) == 0.0))

    # Second check: exercise the multi-tile grid + ragged-M padding path.
    km1, km2 = jax.random.split(km)
    B2, S2 = 4, 500
    emb2 = jax.random.normal(km1, (B2, S2, H), jnp.float32)
    mask2 = (jax.random.uniform(km2, (B2, S2)) > 0.2).astype(jnp.float32)
    fwd2 = jax.jit(lambda p, e, m: attention_layer_forward(p, e, m, row_block=1024))
    out2, am2 = fwd2(params, emb2, mask2)
    jax.block_until_ready((out2, am2))
    assert out2.shape == (B2, S2, H) and am2.shape == (B2, S2, 2)
    _assert_matches_reference(params, emb2, mask2, out2, am2)

    print("KERNEL_OK")
</pallas_src>

<mosaic_0001>
module attributes {stable_mosaic.version = 11 : i64} {
  func.func @_attention_layer_kernel(%arg0: i32, %arg1: memref<4x128xf32, #tpu.memory_space<vmem>>, %arg2: memref<4x4xf32, #tpu.memory_space<vmem>>, %arg3: memref<128x128xf32, #tpu.memory_space<vmem>>, %arg4: memref<1x128xf32, #tpu.memory_space<vmem>>, %arg5: memref<128x8xf32, #tpu.memory_space<vmem>>, %arg6: memref<1x8xf32, #tpu.memory_space<vmem>>, %arg7: memref<8x128xf32, #tpu.memory_space<vmem>>, %arg8: memref<8x128xf32, #tpu.memory_space<vmem>>, %arg9: memref<4x128xf32, #tpu.memory_space<vmem>>, %arg10: memref<128x8xf32, #tpu.memory_space<vmem>>, %arg11: memref<128x8xf32, #tpu.memory_space<vmem>>, %arg12: memref<4x128xf32, #tpu.memory_space<vmem>>, %arg13: memref<4x8xf32, #tpu.memory_space<vmem>>) attributes {dimension_semantics = [#tpu.dimension_semantics<parallel>], iteration_bounds = array<i64: 1>, scalar_prefetch = 0 : i64, scratch_operands = 0 : i64, tpu.core_type = #tpu.core_type<tc>, window_params = [{transform_indices = @transform_0, window_bounds = array<i64: 4, 128>}, {transform_indices = @transform_1, window_bounds = array<i64: 4, 4>}, {pipeline_mode = #tpu.pipeline_mode<synchronous>, transform_indices = @transform_2, window_bounds = array<i64: 128, 128>}, {pipeline_mode = #tpu.pipeline_mode<synchronous>, transform_indices = @transform_3, window_bounds = array<i64: 1, 128>}, {pipeline_mode = #tpu.pipeline_mode<synchronous>, transform_indices = @transform_4, window_bounds = array<i64: 128, 8>}, {pipeline_mode = #tpu.pipeline_mode<synchronous>, transform_indices = @transform_5, window_bounds = array<i64: 1, 8>}, {pipeline_mode = #tpu.pipeline_mode<synchronous>, transform_indices = @transform_6, window_bounds = array<i64: 8, 128>}, {pipeline_mode = #tpu.pipeline_mode<synchronous>, transform_indices = @transform_7, window_bounds = array<i64: 8, 128>}, {pipeline_mode = #tpu.pipeline_mode<synchronous>, transform_indices = @transform_8, window_bounds = array<i64: 4, 128>}, {pipeline_mode = #tpu.pipeline_mode<synchronous>, transform_indices = @transform_9, window_bounds = array<i64: 128, 8>}, {pipeline_mode = #tpu.pipeline_mode<synchronous>, transform_indices = @transform_10, window_bounds = array<i64: 128, 8>}, {transform_indices = @transform_11, window_bounds = array<i64: 4, 128>}, {transform_indices = @transform_12, window_bounds = array<i64: 4, 8>}]} {
    %c0 = arith.constant 0 : index
    %c0_0 = arith.constant 0 : index
    %0 = vector.load %arg1[%c0, %c0_0] : memref<4x128xf32, #tpu.memory_space<vmem>>, vector<4x128xf32>
    %c0_1 = arith.constant 0 : index
    %c0_2 = arith.constant 0 : index
    %1 = vector.load %arg2[%c0_1, %c0_2] : memref<4x4xf32, #tpu.memory_space<vmem>>, vector<4x4xf32>
    %c0_3 = arith.constant 0 : index
    %c0_4 = arith.constant 0 : index
    %2 = vector.load %arg3[%c0_3, %c0_4] : memref<128x128xf32, #tpu.memory_space<vmem>>, vector<128x128xf32>
    %cst = arith.constant dense<0.000000e+00> : vector<4x128xf32>
    %3 = tpu.matmul %0, %2, %cst {dimension_numbers = #tpu.dot_dimension_numbers<[1], [0], [0], [1], [0, 0, 1, 1], [], []>} : vector<4x128xf32>, vector<128x128xf32>, vector<4x128xf32> -> vector<4x128xf32>
    %c0_5 = arith.constant 0 : index
    %c0_6 = arith.constant 0 : index
    %4 = vector.load %arg4[%c0_5, %c0_6] : memref<1x128xf32, #tpu.memory_space<vmem>>, vector<1x128xf32>
    %5 = vector.broadcast %4 : vector<1x128xf32> to vector<4x128xf32>
    %6 = arith.addf %3, %5 : vector<4x128xf32>
    %cst_7 = arith.constant 0.000000e+00 : f32
    %7 = vector.broadcast %cst_7 : f32 to vector<4x128xf32>
    %8 = arith.maximumf %6, %7 : vector<4x128xf32>
    %c0_8 = arith.constant 0 : index
    %c0_9 = arith.constant 0 : index
    %9 = vector.load %arg5[%c0_8, %c0_9] : memref<128x8xf32, #tpu.memory_space<vmem>>, vector<128x8xf32>
    %cst_10 = arith.constant dense<0.000000e+00> : vector<4x8xf32>
    %10 = tpu.matmul %8, %9, %cst_10 {dimension_numbers = #tpu.dot_dimension_numbers<[1], [0], [0], [1], [0, 0, 1, 1], [], []>} : vector<4x128xf32>, vector<128x8xf32>, vector<4x8xf32> -> vector<4x8xf32>
    %c0_11 = arith.constant 0 : index
    %c0_12 = arith.constant 0 : index
    %11 = vector.load %arg6[%c0_11, %c0_12] : memref<1x8xf32, #tpu.memory_space<vmem>>, vector<1x8xf32>
    %12 = vector.broadcast %11 : vector<1x8xf32> to vector<4x8xf32>
    %13 = arith.addf %10, %12 : vector<4x8xf32>
    %c0_13 = arith.constant 0 : index
    %c0_14 = arith.constant 0 : index
    %14 = vector.load %arg7[%c0_13, %c0_14] : memref<8x128xf32, #tpu.memory_space<vmem>>, vector<8x128xf32>
    %cst_15 = arith.constant dense<0.000000e+00> : vector<4x128xf32>
    %15 = tpu.matmul %13, %14, %cst_15 {dimension_numbers = #tpu.dot_dimension_numbers<[1], [0], [0], [1], [0, 0, 1, 1], [], []>} : vector<4x8xf32>, vector<8x128xf32>, vector<4x128xf32> -> vector<4x128xf32>
    %c0_16 = arith.constant 0 : index
    %c0_17 = arith.constant 0 : index
    %16 = vector.load %arg8[%c0_16, %c0_17] : memref<8x128xf32, #tpu.memory_space<vmem>>, vector<8x128xf32>
    %cst_18 = arith.constant dense<0.000000e+00> : vector<4x128xf32>
    %17 = tpu.matmul %13, %16, %cst_18 {dimension_numbers = #tpu.dot_dimension_numbers<[1], [0], [0], [1], [0, 0, 1, 1], [], []>} : vector<4x8xf32>, vector<8x128xf32>, vector<4x128xf32> -> vector<4x128xf32>
    %18 = arith.maximumf %15, %17 : vector<4x128xf32>
    %19 = arith.cmpf oeq, %15, %18 : vector<4x128xf32>
    %20 = arith.extui %19 : vector<4x128xi1> to vector<4x128xi32>
    %21 = arith.sitofp %20 : vector<4x128xi32> to vector<4x128xf32>
    %22 = arith.subf %21, %15 : vector<4x128xf32>
    %23 = arith.addf %22, %15 : vector<4x128xf32>
    %24 = arith.cmpf oeq, %17, %18 : vector<4x128xf32>
    %25 = arith.extui %24 : vector<4x128xi1> to vector<4x128xi32>
    %26 = arith.sitofp %25 : vector<4x128xi32> to vector<4x128xf32>
    %27 = arith.subf %26, %17 : vector<4x128xf32>
    %28 = arith.addf %27, %17 : vector<4x128xf32>
    %c0_19 = arith.constant 0 : index
    %c0_20 = arith.constant 0 : index
    %29 = vector.load %arg9[%c0_19, %c0_20] : memref<4x128xf32, #tpu.memory_space<vmem>>, vector<4x128xf32>
    %cst_21 = arith.constant dense<0.000000e+00> : vector<4x128xf32>
    %30 = tpu.matmul %1, %29, %cst_21 {dimension_numbers = #tpu.dot_dimension_numbers<[1], [0], [0], [1], [0, 0, 1, 1], [], []>} : vector<4x4xf32>, vector<4x128xf32>, vector<4x128xf32> -> vector<4x128xf32>
    %31 = arith.mulf %23, %30 : vector<4x128xf32>
    %32 = arith.mulf %28, %30 : vector<4x128xf32>
    %cst_22 = arith.constant 1.000000e+00 : f32
    %33 = vector.broadcast %cst_22 : f32 to vector<4x128xf32>
    %34 = arith.subf %33, %30 : vector<4x128xf32>
    %35 = arith.addf %32, %34 : vector<4x128xf32>
    %36 = arith.mulf %0, %31 : vector<4x128xf32>
    %c0_23 = arith.constant 0 : index
    %c0_24 = arith.constant 0 : index
    %37 = vector.load %arg12[%c0_23, %c0_24] : memref<4x128xf32, #tpu.memory_space<vmem>>, vector<4x128xf32>
    tpu.vector_store %arg12[%c0_23, %c0_24], %36 {strides = array<i32>} : memref<4x128xf32, #tpu.memory_space<vmem>>, vector<4x128xf32>,
    %c0_25 = arith.constant 0 : index
    %c0_26 = arith.constant 0 : index
    %38 = vector.load %arg10[%c0_25, %c0_26] : memref<128x8xf32, #tpu.memory_space<vmem>>, vector<128x8xf32>
    %cst_27 = arith.constant dense<0.000000e+00> : vector<4x8xf32>
    %39 = tpu.matmul %31, %38, %cst_27 {dimension_numbers = #tpu.dot_dimension_numbers<[1], [0], [0], [1], [0, 0, 1, 1], [], []>} : vector<4x128xf32>, vector<128x8xf32>, vector<4x8xf32> -> vector<4x8xf32>
    %c0_28 = arith.constant 0 : index
    %c0_29 = arith.constant 0 : index
    %40 = vector.load %arg11[%c0_28, %c0_29] : memref<128x8xf32, #tpu.memory_space<vmem>>, vector<128x8xf32>
    %cst_30 = arith.constant dense<0.000000e+00> : vector<4x8xf32>
    %41 = tpu.matmul %35, %40, %cst_30 {dimension_numbers = #tpu.dot_dimension_numbers<[1], [0], [0], [1], [0, 0, 1, 1], [], []>} : vector<4x128xf32>, vector<128x8xf32>, vector<4x8xf32> -> vector<4x8xf32>
    %42 = arith.addf %39, %41 : vector<4x8xf32>
    %c0_31 = arith.constant 0 : index
    %c0_32 = arith.constant 0 : index
    %43 = vector.load %arg13[%c0_31, %c0_32] : memref<4x8xf32, #tpu.memory_space<vmem>>, vector<4x8xf32>
    tpu.vector_store %arg13[%c0_31, %c0_32], %42 {strides = array<i32>} : memref<4x8xf32, #tpu.memory_space<vmem>>, vector<4x8xf32>,
    return
  }
  func.func @transform_0(%arg0: i32) -> (i32, i32) {
    %c0_i32 = arith.constant 0 : i32
    %c0_i32_0 = arith.constant 0 : i32
    return %arg0, %c0_i32 : i32, i32
  }
  func.func @transform_1(%arg0: i32) -> (i32, i32) {
    %c0_i32 = arith.constant 0 : i32
    %c0_i32_0 = arith.constant 0 : i32
    return %arg0, %c0_i32 : i32, i32
  }
  func.func @transform_2(%arg0: i32) -> (i32, i32) {
    %c0_i32 = arith.constant 0 : i32
    %c0_i32_0 = arith.constant 0 : i32
    %c0_i32_1 = arith.constant 0 : i32
    return %c0_i32, %c0_i32_0 : i32, i32
  }
  func.func @transform_3(%arg0: i32) -> (i32, i32) {
    %c0_i32 = arith.constant 0 : i32
    %c0_i32_0 = arith.constant 0 : i32
    %c0_i32_1 = arith.constant 0 : i32
    return %c0_i32, %c0_i32_0 : i32, i32
  }
  func.func @transform_4(%arg0: i32) -> (i32, i32) {
    %c0_i32 = arith.constant 0 : i32
    %c0_i32_0 = arith.constant 0 : i32
    %c0_i32_1 = arith.constant 0 : i32
    return %c0_i32, %c0_i32_0 : i32, i32
  }
  func.func @transform_5(%arg0: i32) -> (i32, i32) {
    %c0_i32 = arith.constant 0 : i32
    %c0_i32_0 = arith.constant 0 : i32
    %c0_i32_1 = arith.constant 0 : i32
    return %c0_i32, %c0_i32_0 : i32, i32
  }
  func.func @transform_6(%arg0: i32) -> (i32, i32) {
    %c0_i32 = arith.constant 0 : i32
    %c0_i32_0 = arith.constant 0 : i32
    %c0_i32_1 = arith.constant 0 : i32
    return %c0_i32, %c0_i32_0 : i32, i32
  }
  func.func @transform_7(%arg0: i32) -> (i32, i32) {
    %c0_i32 = arith.constant 0 : i32
    %c0_i32_0 = arith.constant 0 : i32
    %c0_i32_1 = arith.constant 0 : i32
    return %c0_i32, %c0_i32_0 : i32, i32
  }
  func.func @transform_8(%arg0: i32) -> (i32, i32) {
    %c0_i32 = arith.constant 0 : i32
    %c0_i32_0 = arith.constant 0 : i32
    %c0_i32_1 = arith.constant 0 : i32
    return %c0_i32, %c0_i32_0 : i32, i32
  }
  func.func @transform_9(%arg0: i32) -> (i32, i32) {
    %c0_i32 = arith.constant 0 : i32
    %c0_i32_0 = arith.constant 0 : i32
    %c0_i32_1 = arith.constant 0 : i32
    return %c0_i32, %c0_i32_0 : i32, i32
  }
  func.func @transform_10(%arg0: i32) -> (i32, i32) {
    %c0_i32 = arith.constant 0 : i32
    %c0_i32_0 = arith.constant 0 : i32
    %c0_i32_1 = arith.constant 0 : i32
    return %c0_i32, %c0_i32_0 : i32, i32
  }
  func.func @transform_11(%arg0: i32) -> (i32, i32) {
    %c0_i32 = arith.constant 0 : i32
    %c0_i32_0 = arith.constant 0 : i32
    return %arg0, %c0_i32 : i32, i32
  }
  func.func @transform_12(%arg0: i32) -> (i32, i32) {
    %c0_i32 = arith.constant 0 : i32
    %c0_i32_0 = arith.constant 0 : i32
    return %arg0, %c0_i32 : i32, i32
  }
}

</mosaic_0001>

<llo_original>
// kernel: tile.14
$region0: #{tile.14}
  %s0 = inlined_call_operand.vmem [shape: f32[4,32], index: 0, kind: input, shape index: {}]
  %s1 = inlined_call_operand.vmem [shape: f32[1,128], index: 1, kind: output, shape index: {}]
  $region1: #{tile.14} parent=0
    #allocation0 [shape = 'u8[4096]{0}', space=vmem, size = 0x1000, scoped, tag = 'scoped mem for output reshape']
    #allocation1 [shape = 'u8[4096]{0}', space=vmem, size = 0x1000, scoped, tag = 'scoped mem for input reshape']
    %s3 = ssub.s32 16, 1
    %v4 = vld [vmem:[%s0] sm:%s3]
    %5 = vst [vmem:[#allocation1] sm:%s3] %v4
    %v6 = vld [vmem:[#allocation1] sm:$0x1]
    %vm7 = vcmask 261120
    %8 = vst.msk [vmem:[#allocation0] sm:$0x1] %vm7, %v6
    %s9 = scalar_lea.vmem [#allocation1], 3
    %v10 = vld [vmem:[%s9] sm:$0x1]
    %11 = vrot.lane.b32.xlu0 %v10, 96
    %v12 = vpop.permute.xlu0 %11
    %vm13 = vcmask 1048320
    %14 = vst.msk [vmem:[#allocation0] sm:$0x1] %vm13, %v12
    %s15 = scalar_lea.vmem [#allocation1], 2
    %v16 = vld [vmem:[%s15] sm:$0x1]
    %17 = vrot.lane.b32.xlu0 %v16, 64
    %v18 = vpop.permute.xlu0 %17
    %vm19 = vcmask 785920
    %20 = vst.msk [vmem:[#allocation0] sm:$0x1] %vm19, %v18
    %s21 = scalar_lea.vmem [#allocation1], 1
    %v22 = vld [vmem:[%s21] sm:$0x1]
    %23 = vrot.lane.b32.xlu0 %v22, 32
    %v24 = vpop.permute.xlu0 %23
    %vm25 = vcmask 523520
    %26 = vst.msk [vmem:[#allocation0] sm:$0x1] %vm25, %v24
    %s28 = ssub.s32 2, 1
    %v29 = vld [vmem:[#allocation0] sm:%s28]
    %s31 = ssub.s32 2, 1
    %32 = vst [vmem:[%s1] sm:%s31] %v29

// kernel: tile.18
$region0: #{tile.18}
  #allocation0 [shape = 's32[1]{0}', space=sflag, size = 0x4, scoped, tag = 'scoped memory for tile.18']
  %s0 = inlined_call_operand.vmem [shape: f32[2], index: 0, kind: input, shape index: {}]
  %s1 = inlined_call_operand.vmem [shape: f32[4,2], index: 1, kind: output, shape index: {}]
  // Predicated region
  $region2: #{tile.18} parent=0 // pred_check
    _
  $region3: #{tile.18} parent=0 // pred_check_branch
    %3 = sbr.rel (0) target = $region5
  $region4: #{tile.18} parent=0 // pred_region
    _
  $region5: #{tile.18} parent=0 // pred_fallthru
    _
  %v4 = vld [vmem:[%s0] ss:$0 sm:$0xff]
  %5 = vst [vmem:[%s1] sm:$0xf] %v4

// kernel: tile.13
$region0: #{tile.13}
  #allocation0 [shape = 's32[1]{0}', space=sflag, size = 0x4, scoped, tag = 'scoped memory for tile.13']
  %s0 = inlined_call_operand.vmem [shape: f32[32], index: 0, kind: input, shape index: {}]
  %s1 = inlined_call_operand.vmem [shape: f32[4,32], index: 1, kind: output, shape index: {}]
  // Predicated region
  $region2: #{tile.13} parent=0 // pred_check
    _
  $region3: #{tile.13} parent=0 // pred_check_branch
    %3 = sbr.rel (0) target = $region5
  $region4: #{tile.13} parent=0 // pred_region
    _
  $region5: #{tile.13} parent=0 // pred_fallthru
    _
  %v4 = vld [vmem:[%s0] ss:$0 sm:$0xff]
  %5 = vst [vmem:[%s1] sm:$0xf] %v4

// kernel: tile.19
$region0: #{tile.19}
  %s0 = inlined_call_operand.vmem [shape: f32[4,2], index: 0, kind: input, shape index: {}]
  %s1 = inlined_call_operand.vmem [shape: f32[1,8], index: 1, kind: output, shape index: {}]
  $region1: #{tile.19} parent=0
    #allocation0 [shape = 'u8[4096]{0}', space=vmem, size = 0x1000, scoped, tag = 'scoped mem for output reshape']
    #allocation1 [shape = 'u8[4096]{0}', space=vmem, size = 0x1000, scoped, tag = 'scoped mem for input reshape']
    %s3 = ssub.s32 16, 1
    %v4 = vld [vmem:[%s0] sm:%s3]
    %5 = vst [vmem:[#allocation1] sm:%s3] %v4
    %v6 = vld [vmem:[#allocation1] sm:$0x1]
    %vm7 = vcmask 15360
    %8 = vst.msk [vmem:[#allocation0] sm:$0x1] %vm7, %v6
    %s9 = scalar_lea.vmem [#allocation1], 3
    %v10 = vld [vmem:[%s9] sm:$0x1]
    %11 = vrot.lane.b32.xlu0 %v10, 6
    %v12 = vpop.permute.xlu0 %11
    %vm13 = vcmask 64560
    %14 = vst.msk [vmem:[#allocation0] sm:$0x1] %vm13, %v12
    %s15 = scalar_lea.vmem [#allocation1], 2
    %v16 = vld [vmem:[%s15] sm:$0x1]
    %17 = vrot.lane.b32.xlu0 %v16, 4
    %v18 = vpop.permute.xlu0 %17
    %vm19 = vcmask 48160
    %20 = vst.msk [vmem:[#allocation0] sm:$0x1] %vm19, %v18
    %s21 = scalar_lea.vmem [#allocation1], 1
    %v22 = vld [vmem:[%s21] sm:$0x1]
    %23 = vrot.lane.b32.xlu0 %v22, 2
    %v24 = vpop.permute.xlu0 %23
    %vm25 = vcmask 31760
    %26 = vst.msk [vmem:[#allocation0] sm:$0x1] %vm25, %v24
    %s28 = ssub.s32 2, 1
    %v29 = vld [vmem:[#allocation0] sm:%s28]
    %s31 = ssub.s32 2, 1
    %32 = vst [vmem:[%s1] sm:%s31] %v29

// kernel: attention_layer_forward.1
$region0: #{attention_layer_forward.1}
  #allocation0 [shape = 'u32[]', space=smem, size = 0x4, offset = 0x4, fixed_abs, tag = 'smem constant byte address 0x4 - core index']
  #allocation1 [shape = 'u32[72,128]{1,0:T(1,128)}', space=vmem, size = 0x9000, scoped, tag = 'internal scratch']
  %s0 = inlined_call_operand.vmem [shape: f32[4,128], index: 0, kind: input, shape index: {}]
  %s1 = inlined_call_operand.vmem [shape: f32[4,4], index: 1, kind: input, shape index: {}]
  %s2 = inlined_call_operand.vmem [shape: f32[128,128], index: 2, kind: input, shape index: {}]
  %s3 = inlined_call_operand.vmem [shape: f32[1,128], index: 3, kind: input, shape index: {}]
  %s4 = inlined_call_operand.vmem [shape: f32[128,8], index: 4, kind: input, shape index: {}]
  %s5 = inlined_call_operand.vmem [shape: f32[1,8], index: 5, kind: input, shape index: {}]
  %s6 = inlined_call_operand.vmem [shape: f32[8,128], index: 6, kind: input, shape index: {}]
  %s7 = inlined_call_operand.vmem [shape: f32[8,128], index: 7, kind: input, shape index: {}]
  %s8 = inlined_call_operand.vmem [shape: f32[4,128], index: 8, kind: input, shape index: {}]
  %s9 = inlined_call_operand.vmem [shape: f32[128,8], index: 9, kind: input, shape index: {}]
  %s10 = inlined_call_operand.vmem [shape: f32[128,8], index: 10, kind: input, shape index: {}]
  %s11 = inlined_call_operand.vmem [shape: f32[4,128], index: 11, kind: output, shape index: {0}]
  %s12 = inlined_call_operand.vmem [shape: f32[4,8], index: 12, kind: output, shape index: {1}]
  %13 = xla_tuple %s11, %s12
  %s14 = sld [smem:[#allocation0]]
  $region62: #{attention_layer_forward.1} parent=0
    _
  %s16 = ssub.s32 1, %s14
  %s17 = scalar_select 0, %s16, %s14
  // Predicated region
  $region2: #{attention_layer_forward.1} parent=0 // pred_check
    _
  $region3: #{attention_layer_forward.1} parent=0 // pred_check_branch
    %19 = sbr.rel (0) target = $region5
  $region4: #{attention_layer_forward.1} parent=0 // pred_region
    _
  $region5: #{attention_layer_forward.1} parent=0 // pred_fallthru
    _
  // Predicated region
  $region6: #{attention_layer_forward.1} parent=0 // pred_check
    _
  $region7: #{attention_layer_forward.1} parent=0 // pred_check_branch
    %21 = sbr.rel (0) target = $region9
  $region8: #{attention_layer_forward.1} parent=0 // pred_region
    _
  $region9: #{attention_layer_forward.1} parent=0 // pred_fallthru
    _
  // Predicated region
  $region10: #{attention_layer_forward.1} parent=0 // pred_check
    _
  $region11: #{attention_layer_forward.1} parent=0 // pred_check_branch
    %23 = sbr.rel (0) target = $region13
  $region12: #{attention_layer_forward.1} parent=0 // pred_region
    _
  $region13: #{attention_layer_forward.1} parent=0 // pred_fallthru
    _
  // Predicated region
  $region14: #{attention_layer_forward.1} parent=0 // pred_check
    _
  $region15: #{attention_layer_forward.1} parent=0 // pred_check_branch
    %25 = sbr.rel (0) target = $region17
  $region16: #{attention_layer_forward.1} parent=0 // pred_region
    _
  $region17: #{attention_layer_forward.1} parent=0 // pred_fallthru
    _
  // Predicated region
  $region18: #{attention_layer_forward.1} parent=0 // pred_check
    _
  $region19: #{attention_layer_forward.1} parent=0 // pred_check_branch
    %27 = sbr.rel (0) target = $region21
  $region20: #{attention_layer_forward.1} parent=0 // pred_region
    _
  $region21: #{attention_layer_forward.1} parent=0 // pred_fallthru
    _
  // Predicated region
  $region22: #{attention_layer_forward.1} parent=0 // pred_check
    _
  $region23: #{attention_layer_forward.1} parent=0 // pred_check_branch
    %29 = sbr.rel (0) target = $region25
  $region24: #{attention_layer_forward.1} parent=0 // pred_region
    _
  $region25: #{attention_layer_forward.1} parent=0 // pred_fallthru
    _
  // Predicated region
  $region26: #{attention_layer_forward.1} parent=0 // pred_check
    _
  $region27: #{attention_layer_forward.1} parent=0 // pred_check_branch
    %31 = sbr.rel (0) target = $region29
  $region28: #{attention_layer_forward.1} parent=0 // pred_region
    _
  $region29: #{attention_layer_forward.1} parent=0 // pred_fallthru
    _
  // Predicated region
  $region30: #{attention_layer_forward.1} parent=0 // pred_check
    _
  $region31: #{attention_layer_forward.1} parent=0 // pred_check_branch
    %33 = sbr.rel (0) target = $region33
  $region32: #{attention_layer_forward.1} parent=0 // pred_region
    _
  $region33: #{attention_layer_forward.1} parent=0 // pred_fallthru
    _
  // Predicated region
  $region34: #{attention_layer_forward.1} parent=0 // pred_check
    _
  $region35: #{attention_layer_forward.1} parent=0 // pred_check_branch
    %35 = sbr.rel (0) target = $region37
  $region36: #{attention_layer_forward.1} parent=0 // pred_region
    _
  $region37: #{attention_layer_forward.1} parent=0 // pred_fallthru
    _
  // Predicated region
  $region38: #{attention_layer_forward.1} parent=0 // pred_check
    _
  $region39: #{attention_layer_forward.1} parent=0 // pred_check_branch
    %37 = sbr.rel (0) target = $region41
  $region40: #{attention_layer_forward.1} parent=0 // pred_region
    _
  $region41: #{attention_layer_forward.1} parent=0 // pred_fallthru
    _
  // Predicated region
  $region42: #{attention_layer_forward.1} parent=0 // pred_check
    _
  $region43: #{attention_layer_forward.1} parent=0 // pred_check_branch
    %39 = sbr.rel (0) target = $region45
  $region44: #{attention_layer_forward.1} parent=0 // pred_region
    _
  $region45: #{attention_layer_forward.1} parent=0 // pred_fallthru
    _
  %v40 = vld [vmem:[%s0] sm:$0xf]
  %v41 = vld [vmem:[%s1] sm:$0xf]
  %v42 = vld [vmem:[%s2] sm:$0xff]
  %v43 = vld [vmem:[%s2 + $0x8] sm:$0xff]
  %v44 = vld [vmem:[%s2 + $0x10] sm:$0xff]
  %v45 = vld [vmem:[%s2 + $0x18] sm:$0xff]
  %v46 = vld [vmem:[%s2 + $0x20] sm:$0xff]
  %v47 = vld [vmem:[%s2 + $0x28] sm:$0xff]
  %v48 = vld [vmem:[%s2 + $0x30] sm:$0xff]
  %v49 = vld [vmem:[%s2 + $0x38] sm:$0xff]
  %v50 = vld [vmem:[%s2 + $0x40] sm:$0xff]
  %v51 = vld [vmem:[%s2 + $0x48] sm:$0xff]
  %v52 = vld [vmem:[%s2 + $0x50] sm:$0xff]
  %v53 = vld [vmem:[%s2 + $0x58] sm:$0xff]
  %v54 = vld [vmem:[%s2 + $0x60] sm:$0xff]
  %v55 = vld [vmem:[%s2 + $0x68] sm:$0xff]
  %v56 = vld [vmem:[%s2 + $0x70] sm:$0xff]
  %v57 = vld [vmem:[%s2 + $0x78] sm:$0xff]
  %v58 = vld [vmem:[%s3] sm:$0x1]
  %v60 = vperm.slane %v58, 0
  %62 = vmatpush.msra.mxu0 %v57
  %63 = vmatpush.msra.mxu0 %v56
  %64 = vmatpush.msra.mxu0 %v55
  %65 = vmatpush.msra.mxu0 %v54
  %66 = vmatpush.msra.mxu0 %v53
  %67 = vmatpush.msra.mxu0 %v52
  %68 = vmatpush.msra.mxu0 %v51
  %69 = vmatpush.msra.mxu0 %v50
  %70 = vmatpush.msra.mxu0 %v49
  %71 = vmatpush.msra.mxu0 %v48
  %72 = vmatpush.msra.mxu0 %v47
  %73 = vmatpush.msra.mxu0 %v46
  %74 = vmatpush.msra.mxu0 %v45
  %75 = vmatpush.msra.mxu0 %v44
  %76 = vmatpush.msra.mxu0 %v43
  %77 = vmatpush.msra.mxu0 %v42
  %78 = vmatmul.f32.gmra.mxu0 %v40
  %v79 = vpop.f32.mrf.mxu0
  %v80 = vadd.f32 %v60, %v79
  %81 = vdwg.mxu0
  %v82 = vmax.f32 %v80, 0.0
  %v83 = vld [vmem:[%s4] sm:$0xff]
  %v84 = vld [vmem:[%s4 + $0x8] sm:$0xff]
  %v85 = vld [vmem:[%s4 + $0x10] sm:$0xff]
  %v86 = vld [vmem:[%s4 + $0x18] sm:$0xff]
  %v87 = vld [vmem:[%s4 + $0x20] sm:$0xff]
  %v88 = vld [vmem:[%s4 + $0x28] sm:$0xff]
  %v89 = vld [vmem:[%s4 + $0x30] sm:$0xff]
  %v90 = vld [vmem:[%s4 + $0x38] sm:$0xff]
  %v91 = vld [vmem:[%s4 + $0x40] sm:$0xff]
  %v92 = vld [vmem:[%s4 + $0x48] sm:$0xff]
  %v93 = vld [vmem:[%s4 + $0x50] sm:$0xff]
  %v94 = vld [vmem:[%s4 + $0x58] sm:$0xff]
  %v95 = vld [vmem:[%s4 + $0x60] sm:$0xff]
  %v96 = vld [vmem:[%s4 + $0x68] sm:$0xff]
  %v97 = vld [vmem:[%s4 + $0x70] sm:$0xff]
  %v98 = vld [vmem:[%s4 + $0x78] sm:$0xff]
  %v99 = vld [vmem:[%s5] sm:$0x1]
  %v101 = vperm.slane %v99, 0
  %103 = vmatpush.msra.mxu0 %v98
  %104 = vmatpush.msra.mxu0 %v97
  %105 = vmatpush.msra.mxu0 %v96
  %106 = vmatpush.msra.mxu0 %v95
  %107 = vmatpush.msra.mxu0 %v94
  %108 = vmatpush.msra.mxu0 %v93
  %109 = vmatpush.msra.mxu0 %v92
  %110 = vmatpush.msra.mxu0 %v91
  %111 = vmatpush.msra.mxu0 %v90
  %112 = vmatpush.msra.mxu0 %v89
  %113 = vmatpush.msra.mxu0 %v88
  %114 = vmatpush.msra.mxu0 %v87
  %115 = vmatpush.msra.mxu0 %v86
  %116 = vmatpush.msra.mxu0 %v85
  %117 = vmatpush.msra.mxu0 %v84
  %118 = vmatpush.msra.mxu0 %v83
  %119 = vmatmul.f32.gmra.mxu0 %v82
  %v120 = vpop.f32.mrf.mxu0
  %v121 = vadd.f32 %v101, %v120
  %122 = vdwg.mxu0
  %v123 = vld [vmem:[%s6] sm:$0xff]
  %vm124 = vcmask 64512
  %v126 = vsel %vm124, %v121, 0
  %128 = vmatpush.msra.mxu0 0.0
  %129 = vmatpush.msra.mxu0 0.0
  %130 = vmatpush.msra.mxu0 0.0
  %131 = vmatpush.msra.mxu0 0.0
  %132 = vmatpush.msra.mxu0 0.0
  %133 = vmatpush.msra.mxu0 0.0
  %134 = vmatpush.msra.mxu0 0.0
  %135 = vmatpush.msra.mxu0 0.0
  %136 = vmatpush.msra.mxu0 0.0
  %137 = vmatpush.msra.mxu0 0.0
  %138 = vmatpush.msra.mxu0 0.0
  %139 = vmatpush.msra.mxu0 0.0
  %140 = vmatpush.msra.mxu0 0.0
  %141 = vmatpush.msra.mxu0 0.0
  %142 = vmatpush.msra.mxu0 0.0
  %143 = vmatpush.msra.mxu0 %v123
  %144 = vmatmul.f32.gmra.mxu0 %v126
  %v145 = vpop.f32.mrf.mxu0
  %v146 = vadd.f32 0.0, %v145
  %147 = vdwg.mxu0
  %v148 = vld [vmem:[%s7] sm:$0xff]
  %149 = vmatpush.msra.mxu0 0.0
  %150 = vmatpush.msra.mxu0 0.0
  %151 = vmatpush.msra.mxu0 0.0
  %152 = vmatpush.msra.mxu0 0.0
  %153 = vmatpush.msra.mxu0 0.0
  %154 = vmatpush.msra.mxu0 0.0
  %155 = vmatpush.msra.mxu0 0.0
  %156 = vmatpush.msra.mxu0 0.0
  %157 = vmatpush.msra.mxu0 0.0
  %158 = vmatpush.msra.mxu0 0.0
  %159 = vmatpush.msra.mxu0 0.0
  %160 = vmatpush.msra.mxu0 0.0
  %161 = vmatpush.msra.mxu0 0.0
  %162 = vmatpush.msra.mxu0 0.0
  %163 = vmatpush.msra.mxu0 0.0
  %164 = vmatpush.msra.mxu0 %v148
  %165 = vmatmul.f32.gmra.mxu0 %v126
  %v166 = vpop.f32.mrf.mxu0
  %v167 = vadd.f32 0.0, %v166
  %168 = vdwg.mxu0
  %v169 = vmax.f32 %v146, %v167
  %vm170 = vcmp.eq.f32.partialorder %v146, %v169
  %v171 = vsel %vm170, 1, 0
  %v172 = vcvt.s32.f32 %v171
  %v173 = vsub.f32 %v172, %v146
  %v174 = vadd.f32 %v173, %v146
  %vm175 = vcmp.eq.f32.partialorder %v167, %v169
  %v176 = vsel %vm175, 1, 0
  %v177 = vcvt.s32.f32 %v176
  %v178 = vsub.f32 %v177, %v167
  %v179 = vadd.f32 %v178, %v167
  %v180 = vld [vmem:[%s8] sm:$0xf]
  %vm181 = vcmask 31744
  %v183 = vsel %vm181, %v41, 0
  %vm185 = vcmask 1043456
  %v187 = vsel %vm185, %v180, 0
  %189 = vmatpush.msra.mxu0 0.0
  %190 = vmatpush.msra.mxu0 0.0
  %191 = vmatpush.msra.mxu0 0.0
  %192 = vmatpush.msra.mxu0 0.0
  %193 = vmatpush.msra.mxu0 0.0
  %194 = vmatpush.msra.mxu0 0.0
  %195 = vmatpush.msra.mxu0 0.0
  %196 = vmatpush.msra.mxu0 0.0
  %197 = vmatpush.msra.mxu0 0.0
  %198 = vmatpush.msra.mxu0 0.0
  %199 = vmatpush.msra.mxu0 0.0
  %200 = vmatpush.msra.mxu0 0.0
  %201 = vmatpush.msra.mxu0 0.0
  %202 = vmatpush.msra.mxu0 0.0
  %203 = vmatpush.msra.mxu0 0.0
  %204 = vmatpush.msra.mxu0 %v187
  %205 = vmatmul.f32.gmra.mxu0 %v183
  %v206 = vpop.f32.mrf.mxu0
  %v207 = vadd.f32 0.0, %v206
  %208 = vdwg.mxu0
  %v209 = vmul.f32 %v174, %v207
  %v210 = vmul.f32 %v179, %v207
  %v211 = vsub.f32 1.0, %v207
  %v212 = vadd.f32 %v210, %v211
  %v213 = vmul.f32 %v40, %v209
  %214 = vst [vmem:[%s11] sm:$0xf] %v213
  %v215 = vld [vmem:[%s9] sm:$0xff]
  %v216 = vld [vmem:[%s9 + $0x8] sm:$0xff]
  %v217 = vld [vmem:[%s9 + $0x10] sm:$0xff]
  %v218 = vld [vmem:[%s9 + $0x18] sm:$0xff]
  %v219 = vld [vmem:[%s9 + $0x20] sm:$0xff]
  %v220 = vld [vmem:[%s9 + $0x28] sm:$0xff]
  %v221 = vld [vmem:[%s9 + $0x30] sm:$0xff]
  %v222 = vld [vmem:[%s9 + $0x38] sm:$0xff]
  %v223 = vld [vmem:[%s9 + $0x40] sm:$0xff]
  %v224 = vld [vmem:[%s9 + $0x48] sm:$0xff]
  %v225 = vld [vmem:[%s9 + $0x50] sm:$0xff]
  %v226 = vld [vmem:[%s9 + $0x58] sm:$0xff]
  %v227 = vld [vmem:[%s9 + $0x60] sm:$0xff]
  %v228 = vld [vmem:[%s9 + $0x68] sm:$0xff]
  %v229 = vld [vmem:[%s9 + $0x70] sm:$0xff]
  %v230 = vld [vmem:[%s9 + $0x78] sm:$0xff]
  %v231 = vld [vmem:[%s10] sm:$0xff]
  %v232 = vld [vmem:[%s10 + $0x8] sm:$0xff]
  %v233 = vld [vmem:[%s10 + $0x10] sm:$0xff]
  %v234 = vld [vmem:[%s10 + $0x18] sm:$0xff]
  %v235 = vld [vmem:[%s10 + $0x20] sm:$0xff]
  %v236 = vld [vmem:[%s10 + $0x28] sm:$0xff]
  %v237 = vld [vmem:[%s10 + $0x30] sm:$0xff]
  %v238 = vld [vmem:[%s10 + $0x38] sm:$0xff]
  %v239 = vld [vmem:[%s10 + $0x40] sm:$0xff]
  %v240 = vld [vmem:[%s10 + $0x48] sm:$0xff]
  %v241 = vld [vmem:[%s10 + $0x50] sm:$0xff]
  %v242 = vld [vmem:[%s10 + $0x58] sm:$0xff]
  %v243 = vld [vmem:[%s10 + $0x60] sm:$0xff]
  %v244 = vld [vmem:[%s10 + $0x68] sm:$0xff]
  %v245 = vld [vmem:[%s10 + $0x70] sm:$0xff]
  %v246 = vld [vmem:[%s10 + $0x78] sm:$0xff]
  %247 = vmatpush.msra.mxu0 %v246
  %248 = vmatpush.msra.mxu0 %v245
  %249 = vmatpush.msra.mxu0 %v244
  %250 = vmatpush.msra.mxu0 %v243
  %251 = vmatpush.msra.mxu0 %v242
  %252 = vmatpush.msra.mxu0 %v241
  %253 = vmatpush.msra.mxu0 %v240
  %254 = vmatpush.msra.mxu0 %v239
  %255 = vmatpush.msra.mxu0 %v238
  %256 = vmatpush.msra.mxu0 %v237
  %257 = vmatpush.msra.mxu0 %v236
  %258 = vmatpush.msra.mxu0 %v235
  %259 = vmatpush.msra.mxu0 %v234
  %260 = vmatpush.msra.mxu0 %v233
  %261 = vmatpush.msra.mxu0 %v232
  %262 = vmatpush.msra.mxu0 %v231
  %263 = vmatmul.f32.gmra.mxu0 %v212
  %v264 = vpop.f32.mrf.mxu0
  %v265 = vadd.f32 0.0, %v264
  %266 = vdwg.mxu0
  %267 = vmatpush.msra.mxu0 %v230
  %268 = vmatpush.msra.mxu0 %v229
  %269 = vmatpush.msra.mxu0 %v228
  %270 = vmatpush.msra.mxu0 %v227
  %271 = vmatpush.msra.mxu0 %v226
  %272 = vmatpush.msra.mxu0 %v225
  %273 = vmatpush.msra.mxu0 %v224
  %274 = vmatpush.msra.mxu0 %v223
  %275 = vmatpush.msra.mxu0 %v222
  %276 = vmatpush.msra.mxu0 %v221
  %277 = vmatpush.msra.mxu0 %v220
  %278 = vmatpush.msra.mxu0 %v219
  %279 = vmatpush.msra.mxu0 %v218
  %280 = vmatpush.msra.mxu0 %v217
  %281 = vmatpush.msra.mxu0 %v216
  %282 = vmatpush.msra.mxu0 %v215
  %283 = vmatmul.f32.gmra.mxu0 %v209
  %v284 = vpop.f32.mrf.mxu0
  %v285 = vadd.f32 %v265, %v284
  %286 = vdwg.mxu0
  %vm287 = vcmask 60416
  %288 = vst.msk [vmem:[%s12] sm:$0xf] %vm287, %v285
  // Predicated region
  $region46: #{attention_layer_forward.1} parent=0 // pred_check
    _
  $region47: #{attention_layer_forward.1} parent=0 // pred_check_branch
    %290 = sbr.rel (0) target = $region49
  $region48: #{attention_layer_forward.1} parent=0 // pred_region
    _
  $region49: #{attention_layer_forward.1} parent=0 // pred_fallthru
    _
  // Predicated region
  $region50: #{attention_layer_forward.1} parent=0 // pred_check
    _
  $region51: #{attention_layer_forward.1} parent=0 // pred_check_branch
    %292 = sbr.rel (0) target = $region53
  $region52: #{attention_layer_forward.1} parent=0 // pred_region
    _
  $region53: #{attention_layer_forward.1} parent=0 // pred_fallthru
    _
  // Predicated region
  $region54: #{attention_layer_forward.1} parent=0 // pred_check
    _
  $region55: #{attention_layer_forward.1} parent=0 // pred_check_branch
    %294 = sbr.rel (0) target = $region57
  $region56: #{attention_layer_forward.1} parent=0 // pred_region
    _
  $region57: #{attention_layer_forward.1} parent=0 // pred_fallthru
    _
  // Predicated region
  $region58: #{attention_layer_forward.1} parent=0 // pred_check
    _
  $region59: #{attention_layer_forward.1} parent=0 // pred_check_branch
    %296 = sbr.rel (0) target = $region61
  $region60: #{attention_layer_forward.1} parent=0 // pred_region
    _
  $region61: #{attention_layer_forward.1} parent=0 // pred_fallthru
    _

</llo_original>
